<compile_context>
chip_gen: v7x
topology: tpu7x:2x2x1
jax: 0.10.0
libtpu: 0.0.40
codegen_flags: <defaults>
</compile_context>

<pallas_src>
import functools

import jax
import jax.numpy as jnp
import numpy as np
from jax.experimental import pallas as pl
from jax.experimental.pallas import tpu as pltpu


# ---------------------------------------------------------------------------
# Small helpers
# ---------------------------------------------------------------------------
def _round_up(x, m):
    return (x + m - 1) // m * m


def _pad2d(x, rows, cols):
    pr, pc = rows - x.shape[0], cols - x.shape[1]
    if pr or pc:
        x = jnp.pad(x, ((0, pr), (0, pc)))
    return x


def _cast(x, dtype):
    return x if x.dtype == dtype else x.astype(dtype)


def _tpu_vmem_capacity():
    try:
        info = pltpu.get_tpu_info()
        cap = getattr(info, "vmem_capacity_bytes", None)
        if cap:
            return int(cap)
    except Exception:
        pass
    return 128 * 1024 * 1024  # v5e/v6e physical; conservative fallback


def _vmem_budget():
    # ~15% headroom for compiler-internal scratch / bookkeeping:
    # ~54 MiB on v7x (64 MiB physical), ~108 MiB on v5e/v6e (128 MiB).
    return int(_tpu_vmem_capacity() * 0.85)


def _vmem_limit(est_bytes):
    # Lift v5e's 16 MiB default scoped limit; never ask past the budget cap.
    return int(min(_vmem_budget(), max(32 * 1024 * 1024, 2 * est_bytes)))


def _pick_tile(dim, align, candidates, single_block_cap, max_waste=0.10):
    """Pick a tile size: one minimal-padding block if the dim is small,
    otherwise the largest candidate whose padding overhead stays within
    `max_waste` of the minimal (128-granular) padding."""
    d_min = _round_up(dim, align)
    if d_min <= single_block_cap:
        return d_min
    base = _round_up(dim, candidates[-1])
    for t in candidates:
        if _round_up(dim, t) <= base * (1.0 + max_waste):
            return t
    return candidates[-1]


# ---------------------------------------------------------------------------
# Tiled MXU matmul kernel with optional fused ReLU.
# Grid = (row blocks, col blocks, contraction blocks) = ("parallel",
# "parallel", "arbitrary") -> row/col blocks shard across v7x's 2 TCs.
# ---------------------------------------------------------------------------
def _matmul_kernel(a_ref, b_ref, o_ref, *scratch, apply_relu, single_k):
    if single_k:
        # No reduction loop -> skip the accumulator entirely.
        res = jnp.dot(a_ref[...], b_ref[...], preferred_element_type=jnp.float32)
        if apply_relu:
            res = jnp.maximum(res, 0.0)
        o_ref[...] = res.astype(o_ref.dtype)
        return

    acc_ref = scratch[0]

    @pl.when(pl.program_id(2) == 0)
    def _():
        acc_ref[...] = jnp.zeros_like(acc_ref)

    acc_ref[...] += jnp.dot(a_ref[...], b_ref[...],
                            preferred_element_type=jnp.float32)

    @pl.when(pl.program_id(2) == pl.num_programs(2) - 1)
    def _():
        res = acc_ref[...]
        if apply_relu:
            res = jnp.maximum(res, 0.0)
        o_ref[...] = res.astype(o_ref.dtype)


def pallas_matmul(a, b, *, apply_relu=False, out_dtype=None,
                  tm=None, tn=None, tk=None):
    """out = [relu](a @ b), f32 MXU accumulation, zero-padded to legal tiles."""
    m, k = a.shape
    k2, n = b.shape
    assert k == k2, (a.shape, b.shape)
    out_dtype = out_dtype or a.dtype

    # Adaptive tiles: decouple TM (rows) from TK (contraction, up to 2048 for
    # large efficient DMAs of the dominant operand) and cap padding blow-up.
    tm = tm or _pick_tile(m, 8, (512, 256, 128), single_block_cap=512)
    tn = tn or _pick_tile(n, 128, (512, 256, 128), single_block_cap=512)
    tk = tk or _pick_tile(k, 128, (2048, 1024, 512, 256, 128),
                          single_block_cap=2048)

    a_bytes = jnp.dtype(a.dtype).itemsize
    b_bytes = jnp.dtype(b.dtype).itemsize
    o_bytes = jnp.dtype(out_dtype).itemsize
    budget = _vmem_budget()

    def est(tm_, tn_, tk_):
        e = (2 * tm_ * tk_ * a_bytes       # a block, double buffered
             + 2 * tk_ * tn_ * b_bytes     # b block, double buffered
             + 2 * tm_ * tn_ * o_bytes)    # out block, double buffered
        if _round_up(k, tk_) // tk_ > 1:
            e += tm_ * tn_ * 4             # f32 accumulator scratch
        return e

    def _shrink(t, unit):
        return max(unit, ((t // 2) // unit) * unit)

    # Shrink (contraction tile first) if the plan would overflow VMEM.
    while est(tm, tn, tk) > budget and tk > 128:
        tk = _shrink(tk, 128)
    while est(tm, tn, tk) > budget and tm > 128:
        tm = _shrink(tm, 128)
    while est(tm, tn, tk) > budget and tn > 128:
        tn = _shrink(tn, 128)

    mp, kp, np_ = _round_up(m, tm), _round_up(k, tk), _round_up(n, tn)
    a_p = _pad2d(a, mp, kp)        # no-op when already aligned
    b_p = _pad2d(b, kp, np_)

    nk = kp // tk
    single_k = nk == 1
    vmem_est = est(tm, tn, tk)

    kernel = functools.partial(_matmul_kernel,
                               apply_relu=apply_relu, single_k=single_k)
    out_p = pl.pallas_call(
        kernel,
        out_shape=jax.ShapeDtypeStruct((mp, np_), out_dtype),
        grid_spec=pltpu.PrefetchScalarGridSpec(
            num_scalar_prefetch=0,
            grid=(mp // tm, np_ // tn, nk),
            in_specs=[
                pl.BlockSpec((tm, tk), lambda i, j, kk: (i, kk)),
                pl.BlockSpec((tk, tn), lambda i, j, kk: (kk, j)),
            ],
            out_specs=pl.BlockSpec((tm, tn), lambda i, j, kk: (i, j)),
            scratch_shapes=([] if single_k
                            else [pltpu.VMEM((tm, tn), jnp.float32)]),
        ),
        compiler_params=pltpu.CompilerParams(
            dimension_semantics=("parallel", "parallel", "arbitrary"),
            vmem_limit_bytes=_vmem_limit(vmem_est),
        ),
    )(a_p, b_p)
    return out_p[:m, :n]


# ---------------------------------------------------------------------------
# Public forward: relu(adj @ (inputs @ weight))
# ---------------------------------------------------------------------------
def graph_conv_sparse_forward(inputs, weight, adj, *,
                              compute_dtype=jnp.bfloat16):
    """GraphConvSparse.forward.

    compute_dtype=jnp.bfloat16 (default) halves HBM traffic of the dominant
    N x N adjacency stream (MXU accumulation stays f32); pass jnp.float32 to
    match the PyTorch fp32 reference bit-for-bit in tolerance.  Store adj /
    inputs in compute_dtype upstream to make the cast below a no-op.
    """
    out_dtype = inputs.dtype
    x = _cast(inputs, compute_dtype)
    w = _cast(weight, compute_dtype)
    a = _cast(adj, compute_dtype)

    # Stage 1 (small, hoisted out of the adjacency contraction).
    xw = pallas_matmul(x, w, out_dtype=compute_dtype)
    # Stage 2 (dominant, HBM-bound on adj), ReLU fused into the finalize.
    return pallas_matmul(a, xw, apply_relu=True, out_dtype=out_dtype)


def glorot_init(key, input_dim, output_dim, dtype=jnp.float32):
    # Same as the PyTorch glorot_init: U(-r, r) with r = sqrt(6/(in+out)).
    init_range = np.sqrt(6.0 / (input_dim + output_dim))
    u = jax.random.uniform(key, (input_dim, output_dim), dtype=dtype)
    return u * 2.0 * init_range - init_range


if __name__ == "__main__":
    key = jax.random.PRNGKey(0)
    keys = jax.random.split(key, 8)

    def make_case(kx, kw, ka, n, din, dout):
        x = jax.random.normal(kx, (n, din), dtype=jnp.float32)
        w = glorot_init(kw, din, dout)
        a_raw = (jax.random.uniform(ka, (n, n)) > 0.9).astype(jnp.float32)
        a_raw = a_raw + jnp.eye(n, dtype=jnp.float32)
        a = a_raw / jnp.sum(a_raw, axis=1, keepdims=True)
        return x, w, a

    def ref_forward(x, w, a, dt):
        prec = jax.lax.Precision.HIGHEST
        xw = jnp.dot(x.astype(dt), w.astype(dt), precision=prec,
                     preferred_element_type=jnp.float32).astype(dt)
        o = jnp.dot(a.astype(dt), xw, precision=prec,
                    preferred_element_type=jnp.float32)
        return jnp.maximum(o, 0.0).astype(jnp.float32)

    # Case 1: non-aligned shapes (exercises adaptive tiles + zero padding),
    # f32 compute -> tight match with the torch fp32 reference.
    x1, w1, a1 = make_case(keys[0], keys[1], keys[2], 200, 96, 48)
    out1 = jax.block_until_ready(
        graph_conv_sparse_forward(x1, w1, a1, compute_dtype=jnp.float32))
    np.testing.assert_allclose(np.asarray(out1),
                               np.asarray(ref_forward(x1, w1, a1, jnp.float32)),
                               rtol=1e-5, atol=1e-5)

    # Case 2: default bf16 compute path (HBM-optimized) vs bf16-emulated ref.
    out1b = jax.block_until_ready(graph_conv_sparse_forward(x1, w1, a1))
    np.testing.assert_allclose(np.asarray(out1b),
                               np.asarray(ref_forward(x1, w1, a1, jnp.bfloat16)),
                               rtol=1e-2, atol=1e-2)

    # Case 3: tile-aligned shapes (no padding / cast no-op fast path), f32.
    x3, w3, a3 = make_case(keys[3], keys[4], keys[5], 256, 128, 128)
    out3 = jax.block_until_ready(
        graph_conv_sparse_forward(x3, w3, a3, compute_dtype=jnp.float32))
    np.testing.assert_allclose(np.asarray(out3),
                               np.asarray(ref_forward(x3, w3, a3, jnp.float32)),
                               rtol=1e-5, atol=1e-5)

    # Case 4: multi-step K reduction path of the generic matmul kernel
    # (accumulator scratch + finalize-fused ReLU), small shapes via tk=128.
    a4 = jax.random.normal(keys[6], (64, 640), dtype=jnp.float32)
    b4 = jax.random.normal(keys[7], (640, 48), dtype=jnp.float32)
    out4 = jax.block_until_ready(pallas_matmul(a4, b4, apply_relu=True, tk=128))
    ref4 = jnp.maximum(jnp.dot(a4, b4, precision=jax.lax.Precision.HIGHEST,
                               preferred_element_type=jnp.float32), 0.0)
    np.testing.assert_allclose(np.asarray(out4), np.asarray(ref4),
                               rtol=1e-5, atol=1e-3)

    print("KERNEL_OK")
</pallas_src>

<mosaic_0001>
module attributes {stable_mosaic.version = 11 : i64} {
  func.func @_matmul_kernel(%arg0: i32, %arg1: i32, %arg2: i32, %arg3: memref<200x128xf32, #tpu.memory_space<vmem>>, %arg4: memref<128x128xf32, #tpu.memory_space<vmem>>, %arg5: memref<200x128xf32, #tpu.memory_space<vmem>>) attributes {dimension_semantics = [#tpu.dimension_semantics<parallel>, #tpu.dimension_semantics<parallel>, #tpu.dimension_semantics<arbitrary>], iteration_bounds = array<i64: 1, 1, 1>, scalar_prefetch = 0 : i64, scratch_operands = 0 : i64, tpu.core_type = #tpu.core_type<tc>, window_params = [{transform_indices = @transform_0, window_bounds = array<i64: 200, 128>}, {transform_indices = @transform_1, window_bounds = array<i64: 128, 128>}, {transform_indices = @transform_2, window_bounds = array<i64: 200, 128>}]} {
    %c0 = arith.constant 0 : index
    %c0_0 = arith.constant 0 : index
    %0 = vector.load %arg3[%c0, %c0_0] : memref<200x128xf32, #tpu.memory_space<vmem>>, vector<200x128xf32>
    %c0_1 = arith.constant 0 : index
    %c0_2 = arith.constant 0 : index
    %1 = vector.load %arg4[%c0_1, %c0_2] : memref<128x128xf32, #tpu.memory_space<vmem>>, vector<128x128xf32>
    %cst = arith.constant dense<0.000000e+00> : vector<200x128xf32>
    %2 = tpu.matmul %0, %1, %cst {dimension_numbers = #tpu.dot_dimension_numbers<[1], [0], [0], [1], [0, 0, 1, 1], [], []>} : vector<200x128xf32>, vector<128x128xf32>, vector<200x128xf32> -> vector<200x128xf32>
    %c0_3 = arith.constant 0 : index
    %c0_4 = arith.constant 0 : index
    %3 = vector.load %arg5[%c0_3, %c0_4] : memref<200x128xf32, #tpu.memory_space<vmem>>, vector<200x128xf32>
    tpu.vector_store %arg5[%c0_3, %c0_4], %2 {strides = array<i32>} : memref<200x128xf32, #tpu.memory_space<vmem>>, vector<200x128xf32>,
    return
  }
  func.func @transform_0(%arg0: i32, %arg1: i32, %arg2: i32) -> (i32, i32) {
    %c0_i32 = arith.constant 0 : i32
    return %arg0, %arg2 : i32, i32
  }
  func.func @transform_1(%arg0: i32, %arg1: i32, %arg2: i32) -> (i32, i32) {
    %c0_i32 = arith.constant 0 : i32
    return %arg2, %arg1 : i32, i32
  }
  func.func @transform_2(%arg0: i32, %arg1: i32, %arg2: i32) -> (i32, i32) {
    %c0_i32 = arith.constant 0 : i32
    return %arg0, %arg1 : i32, i32
  }
}

</mosaic_0001>

<llo_original>
// kernel: tpu_custom_call.1
$region0: #{tpu_custom_call.1}
  #allocation0 [shape = 'u32[]', space=smem, size = 0x4, offset = 0x4, fixed_abs, tag = 'smem constant byte address 0x4 - core index']
  #allocation1 [shape = 'u32[144,128]{1,0:T(1,128)}', space=vmem, size = 0x12000, scoped, tag = 'internal scratch']
  %s0 = inlined_call_operand.hbm [shape: f32[200,128], index: 0, kind: input, shape index: {}]
  %s1 = inlined_call_operand.hbm [shape: f32[128,128], index: 1, kind: input, shape index: {}]
  %s2 = inlined_call_operand.hbm [shape: f32[200,128], index: 2, kind: output, shape index: {}]
  %s3 = sld [smem:[#allocation0]]
  $region26: #{tpu_custom_call.1} parent=0
    _
  %s5 = ssub.s32 1, %s3
  %s6 = scalar_select 0, %s5, %s3
  $region1: #{tpu_custom_call.1} parent=0
    #allocation2 [shape = 'u8[102400]{0}', space=vmem, size = 0x19000, scoped, tag = 'input window, operand 0, single buffered']
    #allocation3 [shape = 's32[1]{0}', space=sflag, size = 0x4, scoped, tag = 'scoped memory for tpu_custom_call.1']
    #allocation4 [shape = 's32[1]{0}', space=sflag, size = 0x4, scoped, tag = 'scoped memory for tpu_custom_call.1']
    #allocation5 [shape = 'u8[65536]{0}', space=vmem, size = 0x10000, scoped, tag = 'input window, operand 1, single buffered']
    #allocation6 [shape = 's32[1]{0}', space=sflag, size = 0x4, scoped, tag = 'scoped memory for tpu_custom_call.1']
    #allocation7 [shape = 'u8[102400]{0}', space=vmem, size = 0x19000, scoped, tag = 'output window, operand 0, single buffered']
    %7 = vsyncpa [#allocation3], 0
    %8 = vsyncpa [#allocation6], 0
    %9 = vsyncpa [#allocation4], 0
    // Predicated region
    $region2: #{tpu_custom_call.1} parent=1 // pred_check
      _
    $region3: #{tpu_custom_call.1} parent=1 // pred_check_branch
      %11 = sbr.rel (0) target = $region5
    $region4: #{tpu_custom_call.1} parent=1 // pred_region
      %s13 = ssub.s32 3200, 3200
      %14 = vsyncadd [#allocation3], %s13
      %s15 = sshll.u32 [#allocation2], 4
      %s16 = int_to_ptr.vmem [resolvable:$true] %s15
      %21 = dma.hbm_to_vmem [thread:$0]  %s0, 3200, %s16, [#allocation3], 128, 128, 8
    $region5: #{tpu_custom_call.1} parent=1 // pred_fallthru
      _
    // Predicated region
    $region6: #{tpu_custom_call.1} parent=1 // pred_check
      _
    $region7: #{tpu_custom_call.1} parent=1 // pred_check_branch
      %23 = sbr.rel (0) target = $region9
    $region8: #{tpu_custom_call.1} parent=1 // pred_region
      %s25 = ssub.s32 2048, 2048
      %26 = vsyncadd [#allocation6], %s25
      %s27 = sshll.u32 [#allocation5], 4
      %s28 = int_to_ptr.vmem [resolvable:$true] %s27
      %33 = dma.hbm_to_vmem [thread:$0]  %s1, 2048, %s28, [#allocation6], 128, 128, 8
    $region9: #{tpu_custom_call.1} parent=1 // pred_fallthru
      _
    // Predicated region
    $region10: #{tpu_custom_call.1} parent=1 // pred_check
      _
    $region11: #{tpu_custom_call.1} parent=1 // pred_check_branch
      %35 = sbr.rel (0) target = $region13
    $region12: #{tpu_custom_call.1} parent=1 // pred_region
      %36 = dma.done [#allocation3], 3200
    $region13: #{tpu_custom_call.1} parent=1 // pred_fallthru
      _
    // Predicated region
    $region14: #{tpu_custom_call.1} parent=1 // pred_check
      _
    $region15: #{tpu_custom_call.1} parent=1 // pred_check_branch
      %38 = sbr.rel (0) target = $region17
    $region16: #{tpu_custom_call.1} parent=1 // pred_region
      %39 = dma.done [#allocation6], 2048
    $region17: #{tpu_custom_call.1} parent=1 // pred_fallthru
      _
    %v40 = vld [vmem:[#allocation2] sm:$0xff]
    %v41 = vld [vmem:[#allocation2 + $0x8] sm:$0xff]
    %v42 = vld [vmem:[#allocation2 + $0x10] sm:$0xff]
    %v43 = vld [vmem:[#allocation2 + $0x18] sm:$0xff]
    %v44 = vld [vmem:[#allocation2 + $0x20] sm:$0xff]
    %v45 = vld [vmem:[#allocation2 + $0x28] sm:$0xff]
    %v46 = vld [vmem:[#allocation2 + $0x30] sm:$0xff]
    %v47 = vld [vmem:[#allocation2 + $0x38] sm:$0xff]
    %v48 = vld [vmem:[#allocation2 + $0x40] sm:$0xff]
    %v49 = vld [vmem:[#allocation2 + $0x48] sm:$0xff]
    %v50 = vld [vmem:[#allocation2 + $0x50] sm:$0xff]
    %v51 = vld [vmem:[#allocation2 + $0x58] sm:$0xff]
    %v52 = vld [vmem:[#allocation2 + $0x60] sm:$0xff]
    %v53 = vld [vmem:[#allocation2 + $0x68] sm:$0xff]
    %v54 = vld [vmem:[#allocation2 + $0x70] sm:$0xff]
    %v55 = vld [vmem:[#allocation2 + $0x78] sm:$0xff]
    %v56 = vld [vmem:[#allocation2 + $0x80] sm:$0xff]
    %v57 = vld [vmem:[#allocation2 + $0x88] sm:$0xff]
    %v58 = vld [vmem:[#allocation2 + $0x90] sm:$0xff]
    %v59 = vld [vmem:[#allocation2 + $0x98] sm:$0xff]
    %v60 = vld [vmem:[#allocation2 + $0xa0] sm:$0xff]
    %v61 = vld [vmem:[#allocation2 + $0xa8] sm:$0xff]
    %v62 = vld [vmem:[#allocation2 + $0xb0] sm:$0xff]
    %v63 = vld [vmem:[#allocation2 + $0xb8] sm:$0xff]
    %v64 = vld [vmem:[#allocation2 + $0xc0] sm:$0xff]
    %v65 = vld [vmem:[#allocation5] sm:$0xff]
    %v66 = vld [vmem:[#allocation5 + $0x8] sm:$0xff]
    %v67 = vld [vmem:[#allocation5 + $0x10] sm:$0xff]
    %v68 = vld [vmem:[#allocation5 + $0x18] sm:$0xff]
    %v69 = vld [vmem:[#allocation5 + $0x20] sm:$0xff]
    %v70 = vld [vmem:[#allocation5 + $0x28] sm:$0xff]
    %v71 = vld [vmem:[#allocation5 + $0x30] sm:$0xff]
    %v72 = vld [vmem:[#allocation5 + $0x38] sm:$0xff]
    %v73 = vld [vmem:[#allocation5 + $0x40] sm:$0xff]
    %v74 = vld [vmem:[#allocation5 + $0x48] sm:$0xff]
    %v75 = vld [vmem:[#allocation5 + $0x50] sm:$0xff]
    %v76 = vld [vmem:[#allocation5 + $0x58] sm:$0xff]
    %v77 = vld [vmem:[#allocation5 + $0x60] sm:$0xff]
    %v78 = vld [vmem:[#allocation5 + $0x68] sm:$0xff]
    %v79 = vld [vmem:[#allocation5 + $0x70] sm:$0xff]
    %v80 = vld [vmem:[#allocation5 + $0x78] sm:$0xff]
    %81 = vmatprep.subr.mxu0 0.0
    %82 = vmatpush1.msra.mxu0 %v65
    %83 = vmatprep.subr.mxu0 0.0
    %84 = vmatpush1.msra.mxu0 %v66
    %85 = vmatprep.subr.mxu0 0.0
    %86 = vmatpush1.msra.mxu0 %v67
    %87 = vmatprep.subr.mxu0 0.0
    %88 = vmatpush1.msra.mxu0 %v68
    %89 = vmatprep.subr.mxu0 0.0
    %90 = vmatpush1.msra.mxu0 %v69
    %91 = vmatprep.subr.mxu0 0.0
    %92 = vmatpush1.msra.mxu0 %v70
    %93 = vmatprep.subr.mxu0 0.0
    %94 = vmatpush1.msra.mxu0 %v71
    %95 = vmatprep.subr.mxu0 0.0
    %96 = vmatpush1.msra.mxu0 %v72
    %97 = vmatprep.subr.mxu0 0.0
    %98 = vmatpush1.msra.mxu0 %v73
    %99 = vmatprep.subr.mxu0 0.0
    %100 = vmatpush1.msra.mxu0 %v74
    %101 = vmatprep.subr.mxu0 0.0
    %102 = vmatpush1.msra.mxu0 %v75
    %103 = vmatprep.subr.mxu0 0.0
    %104 = vmatpush1.msra.mxu0 %v76
    %105 = vmatprep.subr.mxu0 0.0
    %106 = vmatpush1.msra.mxu0 %v77
    %107 = vmatprep.subr.mxu0 0.0
    %108 = vmatpush1.msra.mxu0 %v78
    %109 = vmatprep.subr.mxu0 0.0
    %110 = vmatpush1.msra.mxu0 %v79
    %111 = vmatprep.subr.mxu0 0.0
    %112 = vmatpush1.msra.mxu0 %v80
    %113 = vmatprep.subr.mxu0 0.0
    %114 = vmatpush1.msra.mxu0 0.0
    %115 = vmatprep.subr.mxu0 0.0
    %116 = vmatpush1.msra.mxu0 0.0
    %117 = vmatprep.subr.mxu0 0.0
    %118 = vmatpush1.msra.mxu0 0.0
    %119 = vmatprep.subr.mxu0 0.0
    %120 = vmatpush1.msra.mxu0 0.0
    %121 = vmatprep.subr.mxu0 0.0
    %122 = vmatpush1.msra.mxu0 0.0
    %123 = vmatprep.subr.mxu0 0.0
    %124 = vmatpush1.msra.mxu0 0.0
    %125 = vmatprep.subr.mxu0 0.0
    %126 = vmatpush1.msra.mxu0 0.0
    %127 = vmatprep.subr.mxu0 0.0
    %128 = vmatpush1.msra.mxu0 0.0
    %129 = vmatprep.subr.mxu0 0.0
    %130 = vmatpush1.msra.mxu0 0.0
    %131 = vmatprep.subr.mxu0 0.0
    %132 = vmatpush1.msra.mxu0 0.0
    %133 = vmatprep.subr.mxu0 0.0
    %134 = vmatpush1.msra.mxu0 0.0
    %135 = vmatprep.subr.mxu0 0.0
    %136 = vmatpush1.msra.mxu0 0.0
    %137 = vmatprep.subr.mxu0 0.0
    %138 = vmatpush1.msra.mxu0 0.0
    %139 = vmatprep.subr.mxu0 0.0
    %140 = vmatpush1.msra.mxu0 0.0
    %141 = vmatprep.subr.mxu0 0.0
    %142 = vmatpush1.msra.mxu0 0.0
    %143 = vmatprep.subr.mxu0 0.0
    %144 = vmatpush1.msra.mxu0 0.0
    %145 = vmatprep.mubr.f32.mxu0 0.0
    %146 = vmatmul.mubr.f32.gmra.mrb[0].mxu0 %v40
    %v147 = vpop.f32.mrb[0].mxu0
    %v148 = vadd.f32 0.0, %v147
    %v149 = vpop.f32.mrb[0].mxu0
    %150 = vmatprep.mubr.f32.mxu0 0.0
    %151 = vmatmul.mubr.f32.gmra.mrb[0].mxu0 %v41
    %v152 = vpop.f32.mrb[0].mxu0
    %v153 = vadd.f32 0.0, %v152
    %v154 = vpop.f32.mrb[0].mxu0
    %155 = vmatprep.mubr.f32.mxu0 0.0
    %156 = vmatmul.mubr.f32.gmra.mrb[0].mxu0 %v42
    %v157 = vpop.f32.mrb[0].mxu0
    %v158 = vadd.f32 0.0, %v157
    %v159 = vpop.f32.mrb[0].mxu0
    %160 = vmatprep.mubr.f32.mxu0 0.0
    %161 = vmatmul.mubr.f32.gmra.mrb[0].mxu0 %v43
    %v162 = vpop.f32.mrb[0].mxu0
    %v163 = vadd.f32 0.0, %v162
    %v164 = vpop.f32.mrb[0].mxu0
    %165 = vmatprep.mubr.f32.mxu0 0.0
    %166 = vmatmul.mubr.f32.gmra.mrb[0].mxu0 %v44
    %v167 = vpop.f32.mrb[0].mxu0
    %v168 = vadd.f32 0.0, %v167
    %v169 = vpop.f32.mrb[0].mxu0
    %170 = vmatprep.mubr.f32.mxu0 0.0
    %171 = vmatmul.mubr.f32.gmra.mrb[0].mxu0 %v45
    %v172 = vpop.f32.mrb[0].mxu0
    %v173 = vadd.f32 0.0, %v172
    %v174 = vpop.f32.mrb[0].mxu0
    %175 = vmatprep.mubr.f32.mxu0 0.0
    %176 = vmatmul.mubr.f32.gmra.mrb[0].mxu0 %v46
    %v177 = vpop.f32.mrb[0].mxu0
    %v178 = vadd.f32 0.0, %v177
    %v179 = vpop.f32.mrb[0].mxu0
    %180 = vmatprep.mubr.f32.mxu0 0.0
    %181 = vmatmul.mubr.f32.gmra.mrb[0].mxu0 %v47
    %v182 = vpop.f32.mrb[0].mxu0
    %v183 = vadd.f32 0.0, %v182
    %v184 = vpop.f32.mrb[0].mxu0
    %185 = vmatprep.mubr.f32.mxu0 0.0
    %186 = vmatmul.mubr.f32.gmra.mrb[0].mxu0 %v48
    %v187 = vpop.f32.mrb[0].mxu0
    %v188 = vadd.f32 0.0, %v187
    %v189 = vpop.f32.mrb[0].mxu0
    %190 = vmatprep.mubr.f32.mxu0 0.0
    %191 = vmatmul.mubr.f32.gmra.mrb[0].mxu0 %v49
    %v192 = vpop.f32.mrb[0].mxu0
    %v193 = vadd.f32 0.0, %v192
    %v194 = vpop.f32.mrb[0].mxu0
    %195 = vmatprep.mubr.f32.mxu0 0.0
    %196 = vmatmul.mubr.f32.gmra.mrb[0].mxu0 %v50
    %v197 = vpop.f32.mrb[0].mxu0
    %v198 = vadd.f32 0.0, %v197
    %v199 = vpop.f32.mrb[0].mxu0
    %200 = vmatprep.mubr.f32.mxu0 0.0
    %201 = vmatmul.mubr.f32.gmra.mrb[0].mxu0 %v51
    %v202 = vpop.f32.mrb[0].mxu0
    %v203 = vadd.f32 0.0, %v202
    %v204 = vpop.f32.mrb[0].mxu0
    %205 = vmatprep.mubr.f32.mxu0 0.0
    %206 = vmatmul.mubr.f32.gmra.mrb[0].mxu0 %v52
    %v207 = vpop.f32.mrb[0].mxu0
    %v208 = vadd.f32 0.0, %v207
    %v209 = vpop.f32.mrb[0].mxu0
    %210 = vmatprep.mubr.f32.mxu0 0.0
    %211 = vmatmul.mubr.f32.gmra.mrb[0].mxu0 %v53
    %v212 = vpop.f32.mrb[0].mxu0
    %v213 = vadd.f32 0.0, %v212
    %v214 = vpop.f32.mrb[0].mxu0
    %215 = vmatprep.mubr.f32.mxu0 0.0
    %216 = vmatmul.mubr.f32.gmra.mrb[0].mxu0 %v54
    %v217 = vpop.f32.mrb[0].mxu0
    %v218 = vadd.f32 0.0, %v217
    %v219 = vpop.f32.mrb[0].mxu0
    %220 = vmatprep.mubr.f32.mxu0 0.0
    %221 = vmatmul.mubr.f32.gmra.mrb[0].mxu0 %v55
    %v222 = vpop.f32.mrb[0].mxu0
    %v223 = vadd.f32 0.0, %v222
    %v224 = vpop.f32.mrb[0].mxu0
    %225 = vmatprep.mubr.f32.mxu0 0.0
    %226 = vmatmul.mubr.f32.gmra.mrb[0].mxu0 %v56
    %v227 = vpop.f32.mrb[0].mxu0
    %v228 = vadd.f32 0.0, %v227
    %v229 = vpop.f32.mrb[0].mxu0
    %230 = vmatprep.mubr.f32.mxu0 0.0
    %231 = vmatmul.mubr.f32.gmra.mrb[0].mxu0 %v57
    %v232 = vpop.f32.mrb[0].mxu0
    %v233 = vadd.f32 0.0, %v232
    %v234 = vpop.f32.mrb[0].mxu0
    %235 = vmatprep.mubr.f32.mxu0 0.0
    %236 = vmatmul.mubr.f32.gmra.mrb[0].mxu0 %v58
    %v237 = vpop.f32.mrb[0].mxu0
    %v238 = vadd.f32 0.0, %v237
    %v239 = vpop.f32.mrb[0].mxu0
    %240 = vmatprep.mubr.f32.mxu0 0.0
    %241 = vmatmul.mubr.f32.gmra.mrb[0].mxu0 %v59
    %v242 = vpop.f32.mrb[0].mxu0
    %v243 = vadd.f32 0.0, %v242
    %v244 = vpop.f32.mrb[0].mxu0
    %245 = vmatprep.mubr.f32.mxu0 0.0
    %246 = vmatmul.mubr.f32.gmra.mrb[0].mxu0 %v60
    %v247 = vpop.f32.mrb[0].mxu0
    %v248 = vadd.f32 0.0, %v247
    %v249 = vpop.f32.mrb[0].mxu0
    %250 = vmatprep.mubr.f32.mxu0 0.0
    %251 = vmatmul.mubr.f32.gmra.mrb[0].mxu0 %v61
    %v252 = vpop.f32.mrb[0].mxu0
    %v253 = vadd.f32 0.0, %v252
    %v254 = vpop.f32.mrb[0].mxu0
    %255 = vmatprep.mubr.f32.mxu0 0.0
    %256 = vmatmul.mubr.f32.gmra.mrb[0].mxu0 %v62
    %v257 = vpop.f32.mrb[0].mxu0
    %v258 = vadd.f32 0.0, %v257
    %v259 = vpop.f32.mrb[0].mxu0
    %260 = vmatprep.mubr.f32.mxu0 0.0
    %261 = vmatmul.mubr.f32.gmra.mrb[0].mxu0 %v63
    %v262 = vpop.f32.mrb[0].mxu0
    %v263 = vadd.f32 0.0, %v262
    %v264 = vpop.f32.mrb[0].mxu0
    %265 = vmatprep.mubr.f32.mxu0 0.0
    %266 = vmatmul.mubr.f32.gmra.mrb[0].mxu0 %v64
    %v267 = vpop.f32.mrb[0].mxu0
    %v268 = vadd.f32 0.0, %v267
    %v269 = vpop.f32.mrb[0].mxu0
    %270 = vdwg.mxu0
    %271 = vst [vmem:[#allocation7] sm:$0xff] %v148
    %272 = vst [vmem:[#allocation7 + $0x8] sm:$0xff] %v153
    %273 = vst [vmem:[#allocation7 + $0x10] sm:$0xff] %v158
    %274 = vst [vmem:[#allocation7 + $0x18] sm:$0xff] %v163
    %275 = vst [vmem:[#allocation7 + $0x20] sm:$0xff] %v168
    %276 = vst [vmem:[#allocation7 + $0x28] sm:$0xff] %v173
    %277 = vst [vmem:[#allocation7 + $0x30] sm:$0xff] %v178
    %278 = vst [vmem:[#allocation7 + $0x38] sm:$0xff] %v183
    %279 = vst [vmem:[#allocation7 + $0x40] sm:$0xff] %v188
    %280 = vst [vmem:[#allocation7 + $0x48] sm:$0xff] %v193
    %281 = vst [vmem:[#allocation7 + $0x50] sm:$0xff] %v198
    %282 = vst [vmem:[#allocation7 + $0x58] sm:$0xff] %v203
    %283 = vst [vmem:[#allocation7 + $0x60] sm:$0xff] %v208
    %284 = vst [vmem:[#allocation7 + $0x68] sm:$0xff] %v213
    %285 = vst [vmem:[#allocation7 + $0x70] sm:$0xff] %v218
    %286 = vst [vmem:[#allocation7 + $0x78] sm:$0xff] %v223
    %287 = vst [vmem:[#allocation7 + $0x80] sm:$0xff] %v228
    %288 = vst [vmem:[#allocation7 + $0x88] sm:$0xff] %v233
    %289 = vst [vmem:[#allocation7 + $0x90] sm:$0xff] %v238
    %290 = vst [vmem:[#allocation7 + $0x98] sm:$0xff] %v243
    %291 = vst [vmem:[#allocation7 + $0xa0] sm:$0xff] %v248
    %292 = vst [vmem:[#allocation7 + $0xa8] sm:$0xff] %v253
    %293 = vst [vmem:[#allocation7 + $0xb0] sm:$0xff] %v258
    %294 = vst [vmem:[#allocation7 + $0xb8] sm:$0xff] %v263
    %295 = vst [vmem:[#allocation7 + $0xc0] sm:$0xff] %v268
    // Predicated region
    $region18: #{tpu_custom_call.1} parent=1 // pred_check
      _
    $region19: #{tpu_custom_call.1} parent=1 // pred_check_branch
      %297 = sbr.rel (0) target = $region21
    $region20: #{tpu_custom_call.1} parent=1 // pred_region
      %s299 = ssub.s32 3200, 3200
      %300 = vsyncadd [#allocation4], %s299
      %s301 = sshll.u32 [#allocation7], 4
      %s302 = int_to_ptr.vmem [resolvable:$true] %s301
      %307 = dma.vmem_to_hbm [thread:$0]  %s302, 3200, %s2, [#allocation4], 128, 128, 8
    $region21: #{tpu_custom_call.1} parent=1 // pred_fallthru
      _
    // Predicated region
    $region22: #{tpu_custom_call.1} parent=1 // pred_check
      _
    $region23: #{tpu_custom_call.1} parent=1 // pred_check_branch
      %309 = sbr.rel (0) target = $region25
    $region24: #{tpu_custom_call.1} parent=1 // pred_region
      %310 = dma.done [#allocation4], 3200
    $region25: #{tpu_custom_call.1} parent=1 // pred_fallthru
      _
    %311 = vsyncpa [#allocation3], 1
    %312 = vsyncpa [#allocation6], 1
    %313 = vsyncpa [#allocation4], 1

</llo_original>
